<compile_context>
chip_gen: v5e
topology: v5e:2x2
jax: 0.10.0
libtpu: 0.0.40
codegen_flags: <defaults>
</compile_context>

<pallas_src>
from functools import partial

import jax
import jax.numpy as jnp
from jax.experimental import pallas as pl
from jax.experimental.pallas import tpu as pltpu


# ---------------------------------------------------------------------------
# Helpers
# ---------------------------------------------------------------------------
def _round_up(x, m):
    return ((x + m - 1) // m) * m


def _pad_last(x, size):
    pad = size - x.shape[-1]
    if pad == 0:
        return x
    return jnp.pad(x, [(0, 0)] * (x.ndim - 1) + [(0, pad)])


# ---------------------------------------------------------------------------
# One-time parameter packing (hoisted out of any per-step / per-call path).
#
# PyTorch GRUCell semantics (gate order r | z | n):
#   r  = sigmoid(x W_ir + b_ir + h W_hr + b_hr)
#   z  = sigmoid(x W_iz + b_iz + h W_hz + b_hz)
#   n  = tanh  (x W_in + b_in + r * (h W_hn + b_hn))
#   h' = (1 - z) * n + z * h
#   out = h' W_out^T + b_out
#
# Packed (lane-padded) layout:
#   w_i   : (Ip, 3*Hp)  columns [r | z | n]   (x projection)
#   b_i   : (1, 3*Hp)   [b_ir+b_hr | b_iz+b_hz | b_in]   (pre-summed)
#   w_h   : (Hp, 3*Hp)  columns [r | z | n]   (h projection)
#   b_hn  : (1, Hp)     hidden n-gate bias (applied inside r*(...))
#   w_out : (Hp, Op), b_out : (1, Op)
# ---------------------------------------------------------------------------
def prepare_params(params, weights_dtype=jnp.float32):
    """weights_dtype=jnp.bfloat16 halves weight VMEM/DMA and hits the native
    bf16 MXU path on all chips; biases / gate math stay float32."""
    weight_ih = jnp.asarray(params["weight_ih"], jnp.float32)   # (3H, I)
    weight_hh = jnp.asarray(params["weight_hh"], jnp.float32)   # (3H, H)
    bias_ih = jnp.asarray(params["bias_ih"], jnp.float32)       # (3H,)
    bias_hh = jnp.asarray(params["bias_hh"], jnp.float32)       # (3H,)
    w_out = jnp.asarray(params["w_out"], jnp.float32)           # (O, H)
    b_out = jnp.asarray(params["b_out"], jnp.float32)           # (O,)

    H = weight_hh.shape[1]
    I = weight_ih.shape[1]
    O = w_out.shape[0]
    Hp, Ip, Op = _round_up(H, 128), _round_up(I, 128), _round_up(O, 128)

    W_ir, W_iz, W_in = weight_ih[:H], weight_ih[H:2 * H], weight_ih[2 * H:]
    W_hr, W_hz, W_hn = weight_hh[:H], weight_hh[H:2 * H], weight_hh[2 * H:]
    b_ir, b_iz, b_in = bias_ih[:H], bias_ih[H:2 * H], bias_ih[2 * H:]
    b_hr, b_hz, b_hn = bias_hh[:H], bias_hh[H:2 * H], bias_hh[2 * H:]

    w_i = jnp.zeros((Ip, 3 * Hp), jnp.float32)
    w_i = w_i.at[:I, 0 * Hp:0 * Hp + H].set(W_ir.T)
    w_i = w_i.at[:I, 1 * Hp:1 * Hp + H].set(W_iz.T)
    w_i = w_i.at[:I, 2 * Hp:2 * Hp + H].set(W_in.T)

    w_h = jnp.zeros((Hp, 3 * Hp), jnp.float32)
    w_h = w_h.at[:H, 0 * Hp:0 * Hp + H].set(W_hr.T)
    w_h = w_h.at[:H, 1 * Hp:1 * Hp + H].set(W_hz.T)
    w_h = w_h.at[:H, 2 * Hp:2 * Hp + H].set(W_hn.T)

    b_i = jnp.zeros((1, 3 * Hp), jnp.float32)
    b_i = b_i.at[0, 0 * Hp:0 * Hp + H].set(b_ir + b_hr)
    b_i = b_i.at[0, 1 * Hp:1 * Hp + H].set(b_iz + b_hz)
    b_i = b_i.at[0, 2 * Hp:2 * Hp + H].set(b_in)

    b_hn_p = jnp.zeros((1, Hp), jnp.float32).at[0, :H].set(b_hn)

    w_out_p = jnp.zeros((Hp, Op), jnp.float32).at[:H, :O].set(w_out.T)
    b_out_p = jnp.zeros((1, Op), jnp.float32).at[0, :O].set(b_out)

    return {
        "w_i": w_i.astype(weights_dtype),
        "b_i": b_i,
        "w_h": w_h.astype(weights_dtype),
        "b_hn": b_hn_p,
        "w_out": w_out_p.astype(weights_dtype),
        "b_out": b_out_p,
    }


# ---------------------------------------------------------------------------
# Single-step kernel (exact GRU_RNN.forward semantics).
# ---------------------------------------------------------------------------
def gru_step_kernel(x_ref, h_ref, w_i_ref, b_i_ref, w_h_ref, b_hn_ref,
                    w_out_ref, b_out_ref, out_ref, h_new_ref):
    Hp = h_ref.shape[1]
    wdt = w_i_ref.dtype
    h = h_ref[...]

    gi = jnp.dot(x_ref[...].astype(wdt), w_i_ref[...],
                 preferred_element_type=jnp.float32) + b_i_ref[...]
    gh = jnp.dot(h.astype(wdt), w_h_ref[...],
                 preferred_element_type=jnp.float32)

    r = jax.nn.sigmoid(gi[:, 0:Hp] + gh[:, 0:Hp])
    z = jax.nn.sigmoid(gi[:, Hp:2 * Hp] + gh[:, Hp:2 * Hp])
    n = jnp.tanh(gi[:, 2 * Hp:3 * Hp] + r * (gh[:, 2 * Hp:3 * Hp] + b_hn_ref[...]))
    h_new = (1.0 - z) * n + z * h

    out = jnp.dot(h_new.astype(w_out_ref.dtype), w_out_ref[...],
                  preferred_element_type=jnp.float32) + b_out_ref[...]
    out_ref[...] = out.astype(out_ref.dtype)
    h_new_ref[...] = h_new.astype(h_new_ref.dtype)


# ---------------------------------------------------------------------------
# Whole-sequence kernel: no grid — one invocation, time loop inside.
#   prologue : input projection for all timesteps (lane-dense MXU matmul)
#   loop     : only the recurrent (B,Hp)@(Hp,3Hp) matmul + gate math
#   epilogue : one lane-dense readout matmul over all timesteps
# ---------------------------------------------------------------------------
def gru_seq_kernel(x_ref, h0_ref, w_i_ref, b_i_ref, w_h_ref, b_hn_ref,
                   w_out_ref, b_out_ref, out_ref, h_final_ref,
                   gi_ref, h_all_ref):
    TB = x_ref.shape[0]
    B, Hp = h0_ref.shape
    T = TB // B
    wdt = w_i_ref.dtype

    # ---- prologue: x projection for ALL timesteps (off the serial chain) ----
    gi_ref[...] = (jnp.dot(x_ref[...].astype(wdt), w_i_ref[...],
                           preferred_element_type=jnp.float32)
                   + b_i_ref[...])

    # hoisted broadcast of the n-gate hidden bias (1 vreg, lives across loop)
    b_hn = jnp.broadcast_to(b_hn_ref[...], (B, Hp))

    def step(t, h):
        row = pl.multiple_of(t * B, B)
        gi = gi_ref[pl.ds(row, B), :]                              # (B, 3Hp)
        gh = jnp.dot(h.astype(wdt), w_h_ref[...],
                     preferred_element_type=jnp.float32)           # (B, 3Hp)
        r = jax.nn.sigmoid(gi[:, 0:Hp] + gh[:, 0:Hp])
        z = jax.nn.sigmoid(gi[:, Hp:2 * Hp] + gh[:, Hp:2 * Hp])
        n = jnp.tanh(gi[:, 2 * Hp:3 * Hp] + r * (gh[:, 2 * Hp:3 * Hp] + b_hn))
        h_new = (1.0 - z) * n + z * h
        h_all_ref[pl.ds(row, B), :] = h_new
        return h_new

    unroll = True if T <= 16 else 8
    h_final = jax.lax.fori_loop(0, T, step, h0_ref[...], unroll=unroll)

    # ---- epilogue: lane-dense readout for all timesteps at once ----
    out = jnp.dot(h_all_ref[...].astype(w_out_ref.dtype), w_out_ref[...],
                  preferred_element_type=jnp.float32) + b_out_ref[...]
    out_ref[...] = out.astype(out_ref.dtype)
    h_final_ref[...] = h_final.astype(h_final_ref.dtype)


# ---------------------------------------------------------------------------
# Wrappers
# ---------------------------------------------------------------------------
_VMEM = pl.BlockSpec(memory_space=pltpu.MemorySpace.VMEM)


@partial(jax.jit, static_argnames=("out_size",))
def gru_rnn_forward(inputs, hidden, packed, out_size):
    """One GRU_RNN.forward step: returns (output, new_hidden).

    NOTE: do NOT loop/scan over this for sequences — use gru_rnn_rollout,
    which keeps the weights VMEM-resident across the whole sequence.
    """
    B, _ = inputs.shape
    H = hidden.shape[1]
    Ip = packed["w_i"].shape[0]
    Hp = packed["w_h"].shape[0]
    Op = packed["w_out"].shape[1]

    x_p = _pad_last(inputs.astype(jnp.float32), Ip)
    h_p = _pad_last(hidden.astype(jnp.float32), Hp)

    out_p, h_new_p = pl.pallas_call(
        gru_step_kernel,
        out_shape=(
            jax.ShapeDtypeStruct((B, Op), jnp.float32),
            jax.ShapeDtypeStruct((B, Hp), jnp.float32),
        ),
        in_specs=[_VMEM] * 8,
        out_specs=(_VMEM, _VMEM),
    )(x_p, h_p, packed["w_i"], packed["b_i"], packed["w_h"], packed["b_hn"],
      packed["w_out"], packed["b_out"])
    return out_p[:, :out_size], h_new_p[:, :H]


@partial(jax.jit, static_argnames=("out_size",))
def gru_rnn_rollout(inputs_seq, hidden0, packed, out_size):
    """Run the GRU over a whole sequence inside ONE pallas_call (no grid).

    inputs_seq: (T, B, I); returns (outputs (T, B, O), final hidden (B, H)).
    """
    T, B, _ = inputs_seq.shape
    H = hidden0.shape[1]
    Ip = packed["w_i"].shape[0]
    Hp = packed["w_h"].shape[0]
    Op = packed["w_out"].shape[1]

    x_flat = _pad_last(inputs_seq.astype(jnp.float32).reshape(T * B, -1), Ip)
    h0_p = _pad_last(hidden0.astype(jnp.float32), Hp)

    out_flat, h_final_p = pl.pallas_call(
        gru_seq_kernel,
        out_shape=(
            jax.ShapeDtypeStruct((T * B, Op), jnp.float32),
            jax.ShapeDtypeStruct((B, Hp), jnp.float32),
        ),
        in_specs=[_VMEM] * 8,
        out_specs=(_VMEM, _VMEM),
        scratch_shapes=[
            pltpu.VMEM((T * B, 3 * Hp), jnp.float32),   # precomputed x proj
            pltpu.VMEM((T * B, Hp), jnp.float32),       # h_t slab for readout
        ],
    )(x_flat, h0_p, packed["w_i"], packed["b_i"], packed["w_h"], packed["b_hn"],
      packed["w_out"], packed["b_out"])

    outs = out_flat.reshape(T, B, Op)[:, :, :out_size]
    return outs, h_final_p[:, :H]


# ---------------------------------------------------------------------------
# Parameter init + pure-JAX references (PyTorch GRUCell + Linear) for checks.
# ---------------------------------------------------------------------------
def init_params(key, input_size, latent_size, output_size):
    k = jax.random.split(key, 6)
    s = 1.0 / jnp.sqrt(latent_size)
    return {
        "latent_ics": jnp.zeros((latent_size,), jnp.float32),
        "weight_ih": jax.random.uniform(k[0], (3 * latent_size, input_size),
                                        jnp.float32, -s, s),
        "weight_hh": jax.random.uniform(k[1], (3 * latent_size, latent_size),
                                        jnp.float32, -s, s),
        "bias_ih": jax.random.uniform(k[2], (3 * latent_size,),
                                      jnp.float32, -s, s),
        "bias_hh": jax.random.uniform(k[3], (3 * latent_size,),
                                      jnp.float32, -s, s),
        "w_out": jax.random.uniform(k[4], (output_size, latent_size),
                                    jnp.float32, -s, s),
        "b_out": jax.random.uniform(k[5], (output_size,),
                                    jnp.float32, -s, s),
    }


def reference_forward(inputs, hidden, params):
    H = hidden.shape[1]
    gi = inputs @ params["weight_ih"].T + params["bias_ih"]
    gh = hidden @ params["weight_hh"].T + params["bias_hh"]
    i_r, i_z, i_n = gi[:, :H], gi[:, H:2 * H], gi[:, 2 * H:]
    h_r, h_z, h_n = gh[:, :H], gh[:, H:2 * H], gh[:, 2 * H:]
    r = jax.nn.sigmoid(i_r + h_r)
    z = jax.nn.sigmoid(i_z + h_z)
    n = jnp.tanh(i_n + r * h_n)
    h_new = (1.0 - z) * n + z * hidden
    out = h_new @ params["w_out"].T + params["b_out"]
    return out, h_new


def reference_rollout(inputs_seq, hidden, params):
    def step(h, x):
        out, h_new = reference_forward(x, h, params)
        return h_new, out
    h_final, outs = jax.lax.scan(step, hidden, inputs_seq)
    return outs, h_final


if __name__ == "__main__":
    batch, input_size, latent_size, output_size = 8, 16, 32, 8
    seq_len = 8
    latent_ic_var = 0.05

    key = jax.random.PRNGKey(0)
    k_param, k_x, k_noise, k_seq = jax.random.split(key, 4)

    params = init_params(k_param, input_size, latent_size, output_size)
    packed = prepare_params(params)   # f32 weights; bf16 optional on all chips

    inputs = jax.random.normal(k_x, (batch, input_size), jnp.float32)
    # init_hidden: latent_ics broadcast + gaussian noise * latent_ic_var
    hidden = (jnp.broadcast_to(params["latent_ics"], (batch, latent_size))
              + jax.random.normal(k_noise, (batch, latent_size), jnp.float32)
              * latent_ic_var)

    # --- single forward step (module semantics) ---
    out, h_new = gru_rnn_forward(inputs, hidden, packed, out_size=output_size)
    jax.block_until_ready((out, h_new))
    out_ref, h_ref = reference_forward(inputs, hidden, params)
    assert jnp.allclose(out, out_ref, atol=1e-5, rtol=1e-5)
    assert jnp.allclose(h_new, h_ref, atol=1e-5, rtol=1e-5)

    # --- whole-sequence rollout, time loop inside one pallas_call ---
    inputs_seq = jax.random.normal(k_seq, (seq_len, batch, input_size),
                                   jnp.float32)
    outs, h_final = gru_rnn_rollout(inputs_seq, hidden, packed,
                                    out_size=output_size)
    jax.block_until_ready((outs, h_final))
    outs_ref, h_final_ref = reference_rollout(inputs_seq, hidden, params)
    assert jnp.allclose(outs, outs_ref, atol=1e-4, rtol=1e-4)
    assert jnp.allclose(h_final, h_final_ref, atol=1e-4, rtol=1e-4)

    print("KERNEL_OK")
</pallas_src>

<mosaic_0001>
module attributes {stable_mosaic.version = 11 : i64} {
  func.func @gru_step_kernel(%arg0: memref<8x128xf32, #tpu.memory_space<vmem>>, %arg1: memref<8x128xf32, #tpu.memory_space<vmem>>, %arg2: memref<128x384xf32, #tpu.memory_space<vmem>>, %arg3: memref<1x384xf32, #tpu.memory_space<vmem>>, %arg4: memref<128x384xf32, #tpu.memory_space<vmem>>, %arg5: memref<1x128xf32, #tpu.memory_space<vmem>>, %arg6: memref<128x128xf32, #tpu.memory_space<vmem>>, %arg7: memref<1x128xf32, #tpu.memory_space<vmem>>, %arg8: memref<8x128xf32, #tpu.memory_space<vmem>>, %arg9: memref<8x128xf32, #tpu.memory_space<vmem>>) attributes {dimension_semantics = [], scalar_prefetch = 0 : i64, scratch_operands = 0 : i64, tpu.core_type = #tpu.core_type<tc>} {
    %c0 = arith.constant 0 : index
    %c0_0 = arith.constant 0 : index
    %0 = vector.load %arg1[%c0, %c0_0] : memref<8x128xf32, #tpu.memory_space<vmem>>, vector<8x128xf32>
    %c0_1 = arith.constant 0 : index
    %c0_2 = arith.constant 0 : index
    %1 = vector.load %arg0[%c0_1, %c0_2] : memref<8x128xf32, #tpu.memory_space<vmem>>, vector<8x128xf32>
    %c0_3 = arith.constant 0 : index
    %c0_4 = arith.constant 0 : index
    %2 = vector.load %arg2[%c0_3, %c0_4] : memref<128x384xf32, #tpu.memory_space<vmem>>, vector<128x384xf32>
    %cst = arith.constant dense<0.000000e+00> : vector<8x384xf32>
    %3 = tpu.matmul %1, %2, %cst {dimension_numbers = #tpu.dot_dimension_numbers<[1], [0], [0], [1], [0, 0, 1, 1], [], []>} : vector<8x128xf32>, vector<128x384xf32>, vector<8x384xf32> -> vector<8x384xf32>
    %c0_5 = arith.constant 0 : index
    %c0_6 = arith.constant 0 : index
    %4 = vector.load %arg3[%c0_5, %c0_6] : memref<1x384xf32, #tpu.memory_space<vmem>>, vector<1x384xf32>
    %5 = vector.broadcast %4 : vector<1x384xf32> to vector<8x384xf32>
    %6 = arith.addf %3, %5 : vector<8x384xf32>
    %c0_7 = arith.constant 0 : index
    %c0_8 = arith.constant 0 : index
    %7 = vector.load %arg4[%c0_7, %c0_8] : memref<128x384xf32, #tpu.memory_space<vmem>>, vector<128x384xf32>
    %cst_9 = arith.constant dense<0.000000e+00> : vector<8x384xf32>
    %8 = tpu.matmul %0, %7, %cst_9 {dimension_numbers = #tpu.dot_dimension_numbers<[1], [0], [0], [1], [0, 0, 1, 1], [], []>} : vector<8x128xf32>, vector<128x384xf32>, vector<8x384xf32> -> vector<8x384xf32>
    %9 = vector.extract_strided_slice %6 {offsets = [0, 0], sizes = [8, 128], strides = [1, 1]} : vector<8x384xf32> to vector<8x128xf32>
    %10 = vector.extract_strided_slice %8 {offsets = [0, 0], sizes = [8, 128], strides = [1, 1]} : vector<8x384xf32> to vector<8x128xf32>
    %11 = arith.addf %9, %10 : vector<8x128xf32>
    %12 = arith.negf %11 : vector<8x128xf32>
    %13 = math.exp %12 : vector<8x128xf32>
    %cst_10 = arith.constant 1.000000e+00 : f32
    %14 = vector.broadcast %cst_10 : f32 to vector<8x128xf32>
    %15 = arith.addf %14, %13 : vector<8x128xf32>
    %16 = arith.divf %14, %15 : vector<8x128xf32>
    %17 = vector.extract_strided_slice %6 {offsets = [0, 128], sizes = [8, 128], strides = [1, 1]} : vector<8x384xf32> to vector<8x128xf32>
    %18 = vector.extract_strided_slice %8 {offsets = [0, 128], sizes = [8, 128], strides = [1, 1]} : vector<8x384xf32> to vector<8x128xf32>
    %19 = arith.addf %17, %18 : vector<8x128xf32>
    %20 = arith.negf %19 : vector<8x128xf32>
    %21 = math.exp %20 : vector<8x128xf32>
    %cst_11 = arith.constant 1.000000e+00 : f32
    %22 = vector.broadcast %cst_11 : f32 to vector<8x128xf32>
    %23 = arith.addf %22, %21 : vector<8x128xf32>
    %24 = arith.divf %22, %23 : vector<8x128xf32>
    %25 = vector.extract_strided_slice %6 {offsets = [0, 256], sizes = [8, 128], strides = [1, 1]} : vector<8x384xf32> to vector<8x128xf32>
    %26 = vector.extract_strided_slice %8 {offsets = [0, 256], sizes = [8, 128], strides = [1, 1]} : vector<8x384xf32> to vector<8x128xf32>
    %c0_12 = arith.constant 0 : index
    %c0_13 = arith.constant 0 : index
    %27 = vector.load %arg5[%c0_12, %c0_13] : memref<1x128xf32, #tpu.memory_space<vmem>>, vector<1x128xf32>
    %28 = vector.broadcast %27 : vector<1x128xf32> to vector<8x128xf32>
    %29 = arith.addf %26, %28 : vector<8x128xf32>
    %30 = arith.mulf %16, %29 : vector<8x128xf32>
    %31 = arith.addf %25, %30 : vector<8x128xf32>
    %32 = math.tanh %31 : vector<8x128xf32>
    %cst_14 = arith.constant 1.000000e+00 : f32
    %33 = vector.broadcast %cst_14 : f32 to vector<8x128xf32>
    %34 = arith.subf %33, %24 : vector<8x128xf32>
    %35 = arith.mulf %34, %32 : vector<8x128xf32>
    %36 = arith.mulf %24, %0 : vector<8x128xf32>
    %37 = arith.addf %35, %36 : vector<8x128xf32>
    %c0_15 = arith.constant 0 : index
    %c0_16 = arith.constant 0 : index
    %38 = vector.load %arg6[%c0_15, %c0_16] : memref<128x128xf32, #tpu.memory_space<vmem>>, vector<128x128xf32>
    %cst_17 = arith.constant dense<0.000000e+00> : vector<8x128xf32>
    %39 = tpu.matmul %37, %38, %cst_17 {dimension_numbers = #tpu.dot_dimension_numbers<[1], [0], [0], [1], [0, 0, 1, 1], [], []>} : vector<8x128xf32>, vector<128x128xf32>, vector<8x128xf32> -> vector<8x128xf32>
    %c0_18 = arith.constant 0 : index
    %c0_19 = arith.constant 0 : index
    %40 = vector.load %arg7[%c0_18, %c0_19] : memref<1x128xf32, #tpu.memory_space<vmem>>, vector<1x128xf32>
    %41 = vector.broadcast %40 : vector<1x128xf32> to vector<8x128xf32>
    %42 = arith.addf %39, %41 : vector<8x128xf32>
    %c0_20 = arith.constant 0 : index
    %c0_21 = arith.constant 0 : index
    %43 = vector.load %arg8[%c0_20, %c0_21] : memref<8x128xf32, #tpu.memory_space<vmem>>, vector<8x128xf32>
    tpu.vector_store %arg8[%c0_20, %c0_21], %42 {strides = array<i32>} : memref<8x128xf32, #tpu.memory_space<vmem>>, vector<8x128xf32>,
    %c0_22 = arith.constant 0 : index
    %c0_23 = arith.constant 0 : index
    %44 = vector.load %arg9[%c0_22, %c0_23] : memref<8x128xf32, #tpu.memory_space<vmem>>, vector<8x128xf32>
    tpu.vector_store %arg9[%c0_22, %c0_23], %37 {strides = array<i32>} : memref<8x128xf32, #tpu.memory_space<vmem>>, vector<8x128xf32>,
    return
  }
}

</mosaic_0001>

<llo_original>
// kernel: gru_rnn_forward.1
$region0: #{gru_rnn_forward.1}
  #allocation0 [shape = 'u32[]', space=smem, size = 0x4, offset = 0x4, fixed_abs, tag = 'smem constant byte address 0x4 - core index']
  #allocation1 [shape = 'u32[72,128]{1,0:T(1,128)}', space=vmem, size = 0x9000, scoped, tag = 'internal scratch']
  %s0 = inlined_call_operand.vmem [shape: f32[8,128], index: 0, kind: input, shape index: {}]
  %s1 = inlined_call_operand.vmem [shape: f32[8,128], index: 1, kind: input, shape index: {}]
  %s2 = inlined_call_operand.hbm [shape: f32[128,384], index: 2, kind: input, shape index: {}]
  %s3 = inlined_call_operand.vmem [shape: f32[1,384], index: 3, kind: input, shape index: {}]
  %s4 = inlined_call_operand.hbm [shape: f32[128,384], index: 4, kind: input, shape index: {}]
  %s5 = inlined_call_operand.vmem [shape: f32[1,128], index: 5, kind: input, shape index: {}]
  %s6 = inlined_call_operand.hbm [shape: f32[128,128], index: 6, kind: input, shape index: {}]
  %s7 = inlined_call_operand.vmem [shape: f32[1,128], index: 7, kind: input, shape index: {}]
  %s8 = inlined_call_operand.hbm [shape: f32[8,128], index: 8, kind: output, shape index: {0}]
  %s9 = inlined_call_operand.hbm [shape: f32[8,128], index: 9, kind: output, shape index: {1}]
  %10 = xla_tuple %s8, %s9
  %s11 = sld [smem:[#allocation0]]
  $region62: #{gru_rnn_forward.1} parent=0
    _
  %s13 = ssub.s32 1, %s11
  %s14 = scalar_select 0, %s13, %s11
  $region1: #{gru_rnn_forward.1} parent=0
    #allocation2 [shape = 'u8[196608]{0}', space=vmem, size = 0x30000, scoped, tag = 'input window, operand 2, single buffered']
    #allocation3 [shape = 's32[1]{0}', space=sflag, size = 0x4, scoped, tag = 'scoped memory for gru_rnn_forward.1']
    #allocation4 [shape = 's32[1]{0}', space=sflag, size = 0x4, scoped, tag = 'scoped memory for gru_rnn_forward.1']
    #allocation5 [shape = 'u8[196608]{0}', space=vmem, size = 0x30000, scoped, tag = 'input window, operand 4, single buffered']
    #allocation6 [shape = 's32[1]{0}', space=sflag, size = 0x4, scoped, tag = 'scoped memory for gru_rnn_forward.1']
    #allocation7 [shape = 'u8[65536]{0}', space=vmem, size = 0x10000, scoped, tag = 'input window, operand 6, single buffered']
    #allocation8 [shape = 'u8[4096]{0}', space=vmem, size = 0x1000, scoped, tag = 'output window, operand 0, single buffered']
    #allocation9 [shape = 'u8[4096]{0}', space=vmem, size = 0x1000, scoped, tag = 'output window, operand 1, single buffered']
    #allocation10 [shape = 's32[1]{0}', space=sflag, size = 0x4, scoped, tag = 'scoped memory for gru_rnn_forward.1']
    %15 = vsyncpa [#allocation3], 0
    %16 = vsyncpa [#allocation6], 0
    %17 = vsyncpa [#allocation4], 0
    %18 = vsyncpa [#allocation10], 0
    // Predicated region
    $region2: #{gru_rnn_forward.1} parent=1 // pred_check
      _
    $region3: #{gru_rnn_forward.1} parent=1 // pred_check_branch
      %20 = sbr.rel (0) target = $region5
    $region4: #{gru_rnn_forward.1} parent=1 // pred_region
      _
    $region5: #{gru_rnn_forward.1} parent=1 // pred_fallthru
      _
    // Predicated region
    $region6: #{gru_rnn_forward.1} parent=1 // pred_check
      _
    $region7: #{gru_rnn_forward.1} parent=1 // pred_check_branch
      %22 = sbr.rel (0) target = $region9
    $region8: #{gru_rnn_forward.1} parent=1 // pred_region
      _
    $region9: #{gru_rnn_forward.1} parent=1 // pred_fallthru
      _
    // Predicated region
    $region10: #{gru_rnn_forward.1} parent=1 // pred_check
      _
    $region11: #{gru_rnn_forward.1} parent=1 // pred_check_branch
      %24 = sbr.rel (0) target = $region13
    $region12: #{gru_rnn_forward.1} parent=1 // pred_region
      %26 = vsyncadd [#allocation3], 0
      %s27 = sshll.u32 %s2, 4
      %s28 = int_to_ptr.hbm [resolvable:$true] %s27
      %s29 = sshll.u32 [#allocation2], 4
      %s30 = int_to_ptr.vmem [resolvable:$true] %s29
      %35 = dma.hbm_to_vmem [thread:$0]  %s28, 6144, %s30, [#allocation3], 384, 384, 24
    $region13: #{gru_rnn_forward.1} parent=1 // pred_fallthru
      _
    // Predicated region
    $region14: #{gru_rnn_forward.1} parent=1 // pred_check
      _
    $region15: #{gru_rnn_forward.1} parent=1 // pred_check_branch
      %37 = sbr.rel (0) target = $region17
    $region16: #{gru_rnn_forward.1} parent=1 // pred_region
      _
    $region17: #{gru_rnn_forward.1} parent=1 // pred_fallthru
      _
    // Predicated region
    $region18: #{gru_rnn_forward.1} parent=1 // pred_check
      _
    $region19: #{gru_rnn_forward.1} parent=1 // pred_check_branch
      %39 = sbr.rel (0) target = $region21
    $region20: #{gru_rnn_forward.1} parent=1 // pred_region
      %41 = vsyncadd [#allocation6], 0
      %s42 = sshll.u32 %s4, 4
      %s43 = int_to_ptr.hbm [resolvable:$true] %s42
      %s44 = sshll.u32 [#allocation5], 4
      %s45 = int_to_ptr.vmem [resolvable:$true] %s44
      %50 = dma.hbm_to_vmem [thread:$0]  %s43, 6144, %s45, [#allocation6], 384, 384, 24
    $region21: #{gru_rnn_forward.1} parent=1 // pred_fallthru
      _
    // Predicated region
    $region22: #{gru_rnn_forward.1} parent=1 // pred_check
      _
    $region23: #{gru_rnn_forward.1} parent=1 // pred_check_branch
      %52 = sbr.rel (0) target = $region25
    $region24: #{gru_rnn_forward.1} parent=1 // pred_region
      _
    $region25: #{gru_rnn_forward.1} parent=1 // pred_fallthru
      _
    // Predicated region
    $region26: #{gru_rnn_forward.1} parent=1 // pred_check
      _
    $region27: #{gru_rnn_forward.1} parent=1 // pred_check_branch
      %54 = sbr.rel (0) target = $region29
    $region28: #{gru_rnn_forward.1} parent=1 // pred_region
      %56 = vsyncadd [#allocation6], 0
      %s57 = sshll.u32 %s6, 4
      %s58 = int_to_ptr.hbm [resolvable:$true] %s57
      %s59 = sshll.u32 [#allocation7], 4
      %s60 = int_to_ptr.vmem [resolvable:$true] %s59
      %65 = dma.hbm_to_vmem [thread:$0]  %s58, 2048, %s60, [#allocation6], 128, 128, 8
    $region29: #{gru_rnn_forward.1} parent=1 // pred_fallthru
      _
    // Predicated region
    $region30: #{gru_rnn_forward.1} parent=1 // pred_check
      _
    $region31: #{gru_rnn_forward.1} parent=1 // pred_check_branch
      %67 = sbr.rel (0) target = $region33
    $region32: #{gru_rnn_forward.1} parent=1 // pred_region
      _
    $region33: #{gru_rnn_forward.1} parent=1 // pred_fallthru
      _
    // Predicated region
    $region34: #{gru_rnn_forward.1} parent=1 // pred_check
      _
    $region35: #{gru_rnn_forward.1} parent=1 // pred_check_branch
      %69 = sbr.rel (0) target = $region37
    $region36: #{gru_rnn_forward.1} parent=1 // pred_region
      %71 = dma.done [#allocation3], 6144
    $region37: #{gru_rnn_forward.1} parent=1 // pred_fallthru
      _
    // Predicated region
    $region38: #{gru_rnn_forward.1} parent=1 // pred_check
      _
    $region39: #{gru_rnn_forward.1} parent=1 // pred_check_branch
      %73 = sbr.rel (0) target = $region41
    $region40: #{gru_rnn_forward.1} parent=1 // pred_region
      %75 = dma.done [#allocation6], 6144
    $region41: #{gru_rnn_forward.1} parent=1 // pred_fallthru
      _
    // Predicated region
    $region42: #{gru_rnn_forward.1} parent=1 // pred_check
      _
    $region43: #{gru_rnn_forward.1} parent=1 // pred_check_branch
      %77 = sbr.rel (0) target = $region45
    $region44: #{gru_rnn_forward.1} parent=1 // pred_region
      %79 = dma.done [#allocation6], 2048
    $region45: #{gru_rnn_forward.1} parent=1 // pred_fallthru
      _
    %v80 = vld [vmem:[%s1] sm:$0xff]
    %v81 = vld [vmem:[%s0] sm:$0xff]
    %v82 = vld [vmem:[#allocation2] sm:$0xff]
    %v83 = vld [vmem:[#allocation2 + $0x8] sm:$0xff]
    %v84 = vld [vmem:[#allocation2 + $0x10] sm:$0xff]
    %v85 = vld [vmem:[#allocation2 + $0x18] sm:$0xff]
    %v86 = vld [vmem:[#allocation2 + $0x20] sm:$0xff]
    %v87 = vld [vmem:[#allocation2 + $0x28] sm:$0xff]
    %v88 = vld [vmem:[#allocation2 + $0x30] sm:$0xff]
    %v89 = vld [vmem:[#allocation2 + $0x38] sm:$0xff]
    %v90 = vld [vmem:[#allocation2 + $0x40] sm:$0xff]
    %v91 = vld [vmem:[#allocation2 + $0x48] sm:$0xff]
    %v92 = vld [vmem:[#allocation2 + $0x50] sm:$0xff]
    %v93 = vld [vmem:[#allocation2 + $0x58] sm:$0xff]
    %v94 = vld [vmem:[#allocation2 + $0x60] sm:$0xff]
    %v95 = vld [vmem:[#allocation2 + $0x68] sm:$0xff]
    %v96 = vld [vmem:[#allocation2 + $0x70] sm:$0xff]
    %v97 = vld [vmem:[#allocation2 + $0x78] sm:$0xff]
    %v98 = vld [vmem:[#allocation2 + $0x80] sm:$0xff]
    %v99 = vld [vmem:[#allocation2 + $0x88] sm:$0xff]
    %v100 = vld [vmem:[#allocation2 + $0x90] sm:$0xff]
    %v101 = vld [vmem:[#allocation2 + $0x98] sm:$0xff]
    %v102 = vld [vmem:[#allocation2 + $0xa0] sm:$0xff]
    %v103 = vld [vmem:[#allocation2 + $0xa8] sm:$0xff]
    %v104 = vld [vmem:[#allocation2 + $0xb0] sm:$0xff]
    %v105 = vld [vmem:[#allocation2 + $0xb8] sm:$0xff]
    %v106 = vld [vmem:[#allocation2 + $0xc0] sm:$0xff]
    %v107 = vld [vmem:[#allocation2 + $0xc8] sm:$0xff]
    %v108 = vld [vmem:[#allocation2 + $0xd0] sm:$0xff]
    %v109 = vld [vmem:[#allocation2 + $0xd8] sm:$0xff]
    %v110 = vld [vmem:[#allocation2 + $0xe0] sm:$0xff]
    %v111 = vld [vmem:[#allocation2 + $0xe8] sm:$0xff]
    %v112 = vld [vmem:[#allocation2 + $0xf0] sm:$0xff]
    %v113 = vld [vmem:[#allocation2 + $0xf8] sm:$0xff]
    %v114 = vld [vmem:[#allocation2 + $0x100] sm:$0xff]
    %v115 = vld [vmem:[#allocation2 + $0x108] sm:$0xff]
    %v116 = vld [vmem:[#allocation2 + $0x110] sm:$0xff]
    %v117 = vld [vmem:[#allocation2 + $0x118] sm:$0xff]
    %v118 = vld [vmem:[#allocation2 + $0x120] sm:$0xff]
    %v119 = vld [vmem:[#allocation2 + $0x128] sm:$0xff]
    %v120 = vld [vmem:[#allocation2 + $0x130] sm:$0xff]
    %v121 = vld [vmem:[#allocation2 + $0x138] sm:$0xff]
    %v122 = vld [vmem:[#allocation2 + $0x140] sm:$0xff]
    %v123 = vld [vmem:[#allocation2 + $0x148] sm:$0xff]
    %v124 = vld [vmem:[#allocation2 + $0x150] sm:$0xff]
    %v125 = vld [vmem:[#allocation2 + $0x158] sm:$0xff]
    %v126 = vld [vmem:[#allocation2 + $0x160] sm:$0xff]
    %v127 = vld [vmem:[#allocation2 + $0x168] sm:$0xff]
    %v128 = vld [vmem:[#allocation2 + $0x170] sm:$0xff]
    %v129 = vld [vmem:[#allocation2 + $0x178] sm:$0xff]
    %v130 = vld [vmem:[%s3] sm:$0x7]
    %v132 = vperm.slane %v130, 0
    %v133 = vperm.slane %v130, 1
    %v134 = vperm.slane %v130, 2
    %138 = vmatpush.msra.mxu0 %v127
    %139 = vmatpush.msra.mxu0 %v124
    %140 = vmatpush.msra.mxu0 %v121
    %141 = vmatpush.msra.mxu0 %v118
    %142 = vmatpush.msra.mxu0 %v115
    %143 = vmatpush.msra.mxu0 %v112
    %144 = vmatpush.msra.mxu0 %v109
    %145 = vmatpush.msra.mxu0 %v106
    %146 = vmatpush.msra.mxu0 %v103
    %147 = vmatpush.msra.mxu0 %v100
    %148 = vmatpush.msra.mxu0 %v97
    %149 = vmatpush.msra.mxu0 %v94
    %150 = vmatpush.msra.mxu0 %v91
    %151 = vmatpush.msra.mxu0 %v88
    %152 = vmatpush.msra.mxu0 %v85
    %153 = vmatpush.msra.mxu0 %v82
    %154 = vmatmul.f32.gmra.mxu0 %v81
    %v155 = vpop.f32.mrf.mxu0
    %v156 = vadd.f32 %v132, %v155
    %157 = vdwg.mxu0
    %158 = vmatpush.msra.mxu0 %v128
    %159 = vmatpush.msra.mxu0 %v125
    %160 = vmatpush.msra.mxu0 %v122
    %161 = vmatpush.msra.mxu0 %v119
    %162 = vmatpush.msra.mxu0 %v116
    %163 = vmatpush.msra.mxu0 %v113
    %164 = vmatpush.msra.mxu0 %v110
    %165 = vmatpush.msra.mxu0 %v107
    %166 = vmatpush.msra.mxu0 %v104
    %167 = vmatpush.msra.mxu0 %v101
    %168 = vmatpush.msra.mxu0 %v98
    %169 = vmatpush.msra.mxu0 %v95
    %170 = vmatpush.msra.mxu0 %v92
    %171 = vmatpush.msra.mxu0 %v89
    %172 = vmatpush.msra.mxu0 %v86
    %173 = vmatpush.msra.mxu0 %v83
    %174 = vmatmul.f32.gmra.mxu0 %v81
    %v175 = vpop.f32.mrf.mxu0
    %v176 = vadd.f32 %v133, %v175
    %177 = vdwg.mxu0
    %178 = vmatpush.msra.mxu0 %v129
    %179 = vmatpush.msra.mxu0 %v126
    %180 = vmatpush.msra.mxu0 %v123
    %181 = vmatpush.msra.mxu0 %v120
    %182 = vmatpush.msra.mxu0 %v117
    %183 = vmatpush.msra.mxu0 %v114
    %184 = vmatpush.msra.mxu0 %v111
    %185 = vmatpush.msra.mxu0 %v108
    %186 = vmatpush.msra.mxu0 %v105
    %187 = vmatpush.msra.mxu0 %v102
    %188 = vmatpush.msra.mxu0 %v99
    %189 = vmatpush.msra.mxu0 %v96
    %190 = vmatpush.msra.mxu0 %v93
    %191 = vmatpush.msra.mxu0 %v90
    %192 = vmatpush.msra.mxu0 %v87
    %193 = vmatpush.msra.mxu0 %v84
    %194 = vmatmul.f32.gmra.mxu0 %v81
    %v195 = vpop.f32.mrf.mxu0
    %v196 = vadd.f32 %v134, %v195
    %197 = vdwg.mxu0
    %v198 = vld [vmem:[#allocation5] sm:$0xff]
    %v199 = vld [vmem:[#allocation5 + $0x8] sm:$0xff]
    %v200 = vld [vmem:[#allocation5 + $0x10] sm:$0xff]
    %v201 = vld [vmem:[#allocation5 + $0x18] sm:$0xff]
    %v202 = vld [vmem:[#allocation5 + $0x20] sm:$0xff]
    %v203 = vld [vmem:[#allocation5 + $0x28] sm:$0xff]
    %v204 = vld [vmem:[#allocation5 + $0x30] sm:$0xff]
    %v205 = vld [vmem:[#allocation5 + $0x38] sm:$0xff]
    %v206 = vld [vmem:[#allocation5 + $0x40] sm:$0xff]
    %v207 = vld [vmem:[#allocation5 + $0x48] sm:$0xff]
    %v208 = vld [vmem:[#allocation5 + $0x50] sm:$0xff]
    %v209 = vld [vmem:[#allocation5 + $0x58] sm:$0xff]
    %v210 = vld [vmem:[#allocation5 + $0x60] sm:$0xff]
    %v211 = vld [vmem:[#allocation5 + $0x68] sm:$0xff]
    %v212 = vld [vmem:[#allocation5 + $0x70] sm:$0xff]
    %v213 = vld [vmem:[#allocation5 + $0x78] sm:$0xff]
    %v214 = vld [vmem:[#allocation5 + $0x80] sm:$0xff]
    %v215 = vld [vmem:[#allocation5 + $0x88] sm:$0xff]
    %v216 = vld [vmem:[#allocation5 + $0x90] sm:$0xff]
    %v217 = vld [vmem:[#allocation5 + $0x98] sm:$0xff]
    %v218 = vld [vmem:[#allocation5 + $0xa0] sm:$0xff]
    %v219 = vld [vmem:[#allocation5 + $0xa8] sm:$0xff]
    %v220 = vld [vmem:[#allocation5 + $0xb0] sm:$0xff]
    %v221 = vld [vmem:[#allocation5 + $0xb8] sm:$0xff]
    %v222 = vld [vmem:[#allocation5 + $0xc0] sm:$0xff]
    %v223 = vld [vmem:[#allocation5 + $0xc8] sm:$0xff]
    %v224 = vld [vmem:[#allocation5 + $0xd0] sm:$0xff]
    %v225 = vld [vmem:[#allocation5 + $0xd8] sm:$0xff]
    %v226 = vld [vmem:[#allocation5 + $0xe0] sm:$0xff]
    %v227 = vld [vmem:[#allocation5 + $0xe8] sm:$0xff]
    %v228 = vld [vmem:[#allocation5 + $0xf0] sm:$0xff]
    %v229 = vld [vmem:[#allocation5 + $0xf8] sm:$0xff]
    %v230 = vld [vmem:[#allocation5 + $0x100] sm:$0xff]
    %v231 = vld [vmem:[#allocation5 + $0x108] sm:$0xff]
    %v232 = vld [vmem:[#allocation5 + $0x110] sm:$0xff]
    %v233 = vld [vmem:[#allocation5 + $0x118] sm:$0xff]
    %v234 = vld [vmem:[#allocation5 + $0x120] sm:$0xff]
    %v235 = vld [vmem:[#allocation5 + $0x128] sm:$0xff]
    %v236 = vld [vmem:[#allocation5 + $0x130] sm:$0xff]
    %v237 = vld [vmem:[#allocation5 + $0x138] sm:$0xff]
    %v238 = vld [vmem:[#allocation5 + $0x140] sm:$0xff]
    %v239 = vld [vmem:[#allocation5 + $0x148] sm:$0xff]
    %v240 = vld [vmem:[#allocation5 + $0x150] sm:$0xff]
    %v241 = vld [vmem:[#allocation5 + $0x158] sm:$0xff]
    %v242 = vld [vmem:[#allocation5 + $0x160] sm:$0xff]
    %v243 = vld [vmem:[#allocation5 + $0x168] sm:$0xff]
    %v244 = vld [vmem:[#allocation5 + $0x170] sm:$0xff]
    %v245 = vld [vmem:[#allocation5 + $0x178] sm:$0xff]
    %246 = vmatpush.msra.mxu0 %v243
    %247 = vmatpush.msra.mxu0 %v240
    %248 = vmatpush.msra.mxu0 %v237
    %249 = vmatpush.msra.mxu0 %v234
    %250 = vmatpush.msra.mxu0 %v231
    %251 = vmatpush.msra.mxu0 %v228
    %252 = vmatpush.msra.mxu0 %v225
    %253 = vmatpush.msra.mxu0 %v222
    %254 = vmatpush.msra.mxu0 %v219
    %255 = vmatpush.msra.mxu0 %v216
    %256 = vmatpush.msra.mxu0 %v213
    %257 = vmatpush.msra.mxu0 %v210
    %258 = vmatpush.msra.mxu0 %v207
    %259 = vmatpush.msra.mxu0 %v204
    %260 = vmatpush.msra.mxu0 %v201
    %261 = vmatpush.msra.mxu0 %v198
    %262 = vmatmul.f32.gmra.mxu0 %v80
    %v263 = vpop.f32.mrf.mxu0
    %v264 = vadd.f32 0.0, %v263
    %265 = vdwg.mxu0
    %266 = vmatpush.msra.mxu0 %v244
    %267 = vmatpush.msra.mxu0 %v241
    %268 = vmatpush.msra.mxu0 %v238
    %269 = vmatpush.msra.mxu0 %v235
    %270 = vmatpush.msra.mxu0 %v232
    %271 = vmatpush.msra.mxu0 %v229
    %272 = vmatpush.msra.mxu0 %v226
    %273 = vmatpush.msra.mxu0 %v223
    %274 = vmatpush.msra.mxu0 %v220
    %275 = vmatpush.msra.mxu0 %v217
    %276 = vmatpush.msra.mxu0 %v214
    %277 = vmatpush.msra.mxu0 %v211
    %278 = vmatpush.msra.mxu0 %v208
    %279 = vmatpush.msra.mxu0 %v205
    %280 = vmatpush.msra.mxu0 %v202
    %281 = vmatpush.msra.mxu0 %v199
    %282 = vmatmul.f32.gmra.mxu0 %v80
    %v283 = vpop.f32.mrf.mxu0
    %v284 = vadd.f32 0.0, %v283
    %285 = vdwg.mxu0
    %286 = vmatpush.msra.mxu0 %v245
    %287 = vmatpush.msra.mxu0 %v242
    %288 = vmatpush.msra.mxu0 %v239
    %289 = vmatpush.msra.mxu0 %v236
    %290 = vmatpush.msra.mxu0 %v233
    %291 = vmatpush.msra.mxu0 %v230
    %292 = vmatpush.msra.mxu0 %v227
    %293 = vmatpush.msra.mxu0 %v224
    %294 = vmatpush.msra.mxu0 %v221
    %295 = vmatpush.msra.mxu0 %v218
    %296 = vmatpush.msra.mxu0 %v215
    %297 = vmatpush.msra.mxu0 %v212
    %298 = vmatpush.msra.mxu0 %v209
    %299 = vmatpush.msra.mxu0 %v206
    %300 = vmatpush.msra.mxu0 %v203
    %301 = vmatpush.msra.mxu0 %v200
    %302 = vmatmul.f32.gmra.mxu0 %v80
    %v303 = vpop.f32.mrf.mxu0
    %v304 = vadd.f32 0.0, %v303
    %305 = vdwg.mxu0
    %v306 = vadd.f32 %v156, %v264
    %v307 = vxor.u32 %v306, 2147483648
    %v308 = vmul.f32 %v307, 1.442695
    %v309 = vpow.pop %v308
    %v310 = vadd.f32 %v309, 1.0
    %v311 = vrcp.pop %v310
    %v312 = vmul.f32 %v310, %v311
    %v313 = vsub.f32 1.0, %v312
    %v314 = vmul.f32 %v311, %v313
    %v315 = vadd.f32 %v311, %v314
    %vm316 = vweird.f32 %v310
    %vm317 = vweird.f32 %v311
    %vm318 = vmor %vm316, %vm317
    %v319 = vsel %vm318, %v311, %v315
    %v320 = vand.u32 2147483647, %v310
    %vm321 = vcmp.eq.f32.partialorder %v320, 8.507059e+37
    %v322 = vand.u32 %v310, 2147483648
    %v323 = vor.u32 1.1754944e-38, %v322
    %v324 = vsel %vm321, %v323, %v319
    %v325 = vmul.f32 1.0, %v324
    %v326 = vadd.f32 %v176, %v284
    %v327 = vxor.u32 %v326, 2147483648
    %v328 = vmul.f32 %v327, 1.442695
    %v329 = vpow.pop %v328
    %v330 = vadd.f32 %v329, 1.0
    %v331 = vrcp.pop %v330
    %v332 = vmul.f32 %v330, %v331
    %v333 = vsub.f32 1.0, %v332
    %v334 = vmul.f32 %v331, %v333
    %v335 = vadd.f32 %v331, %v334
    %vm336 = vweird.f32 %v330
    %vm337 = vweird.f32 %v331
    %vm338 = vmor %vm336, %vm337
    %v339 = vsel %vm338, %v331, %v335
    %v340 = vand.u32 2147483647, %v330
    %vm341 = vcmp.eq.f32.partialorder %v340, 8.507059e+37
    %v342 = vand.u32 %v330, 2147483648
    %v343 = vor.u32 1.1754944e-38, %v342
    %v344 = vsel %vm341, %v343, %v339
    %v345 = vmul.f32 1.0, %v344
    %v346 = vld [vmem:[%s5] sm:$0x1]
    %v348 = vperm.slane %v346, 0
    %v350 = vadd.f32 %v304, %v348
    %v351 = vmul.f32 %v325, %v350
    %v352 = vadd.f32 %v196, %v351
    %v353 = vtanh.pop %v352
    %v354 = vsub.f32 1.0, %v345
    %v355 = vmul.f32 %v354, %v353
    %v356 = vmul.f32 %v345, %v80
    %v357 = vadd.f32 %v355, %v356
    %v358 = vld [vmem:[#allocation7] sm:$0xff]
    %v359 = vld [vmem:[#allocation7 + $0x8] sm:$0xff]
    %v360 = vld [vmem:[#allocation7 + $0x10] sm:$0xff]
    %v361 = vld [vmem:[#allocation7 + $0x18] sm:$0xff]
    %v362 = vld [vmem:[#allocation7 + $0x20] sm:$0xff]
    %v363 = vld [vmem:[#allocation7 + $0x28] sm:$0xff]
    %v364 = vld [vmem:[#allocation7 + $0x30] sm:$0xff]
    %v365 = vld [vmem:[#allocation7 + $0x38] sm:$0xff]
    %v366 = vld [vmem:[#allocation7 + $0x40] sm:$0xff]
    %v367 = vld [vmem:[#allocation7 + $0x48] sm:$0xff]
    %v368 = vld [vmem:[#allocation7 + $0x50] sm:$0xff]
    %v369 = vld [vmem:[#allocation7 + $0x58] sm:$0xff]
    %v370 = vld [vmem:[#allocation7 + $0x60] sm:$0xff]
    %v371 = vld [vmem:[#allocation7 + $0x68] sm:$0xff]
    %v372 = vld [vmem:[#allocation7 + $0x70] sm:$0xff]
    %v373 = vld [vmem:[#allocation7 + $0x78] sm:$0xff]
    %v374 = vld [vmem:[%s7] sm:$0x1]
    %v376 = vperm.slane %v374, 0
    %378 = vmatpush.msra.mxu0 %v373
    %379 = vmatpush.msra.mxu0 %v372
    %380 = vmatpush.msra.mxu0 %v371
    %381 = vmatpush.msra.mxu0 %v370
    %382 = vmatpush.msra.mxu0 %v369
    %383 = vmatpush.msra.mxu0 %v368
    %384 = vmatpush.msra.mxu0 %v367
    %385 = vmatpush.msra.mxu0 %v366
    %386 = vmatpush.msra.mxu0 %v365
    %387 = vmatpush.msra.mxu0 %v364
    %388 = vmatpush.msra.mxu0 %v363
    %389 = vmatpush.msra.mxu0 %v362
    %390 = vmatpush.msra.mxu0 %v361
    %391 = vmatpush.msra.mxu0 %v360
    %392 = vmatpush.msra.mxu0 %v359
    %393 = vmatpush.msra.mxu0 %v358
    %394 = vmatmul.f32.gmra.mxu0 %v357
    %v395 = vpop.f32.mrf.mxu0
    %v396 = vadd.f32 %v376, %v395
    %397 = vdwg.mxu0
    %398 = vst [vmem:[#allocation8] sm:$0xff] %v396
    %399 = vst [vmem:[#allocation9] sm:$0xff] %v357
    // Predicated region
    $region46: #{gru_rnn_forward.1} parent=1 // pred_check
      _
    $region47: #{gru_rnn_forward.1} parent=1 // pred_check_branch
      %401 = sbr.rel (0) target = $region49
    $region48: #{gru_rnn_forward.1} parent=1 // pred_region
      %403 = vsyncadd [#allocation4], 0
      %s405 = sshll.u32 [#allocation8], 4
      %s406 = int_to_ptr.vmem [resolvable:$true] %s405
      %s407 = sshll.u32 %s8, 4
      %s408 = int_to_ptr.hbm [resolvable:$true] %s407
      %410 = dma.vmem_to_hbm [thread:$0]  %s406, 128, %s408, [#allocation4]
    $region49: #{gru_rnn_forward.1} parent=1 // pred_fallthru
      _
    // Predicated region
    $region50: #{gru_rnn_forward.1} parent=1 // pred_check
      _
    $region51: #{gru_rnn_forward.1} parent=1 // pred_check_branch
      %412 = sbr.rel (0) target = $region53
    $region52: #{gru_rnn_forward.1} parent=1 // pred_region
      %414 = vsyncadd [#allocation10], 0
      %s416 = sshll.u32 [#allocation9], 4
      %s417 = int_to_ptr.vmem [resolvable:$true] %s416
      %s418 = sshll.u32 %s9, 4
      %s419 = int_to_ptr.hbm [resolvable:$true] %s418
      %421 = dma.vmem_to_hbm [thread:$0]  %s417, 128, %s419, [#allocation10]
    $region53: #{gru_rnn_forward.1} parent=1 // pred_fallthru
      _
    // Predicated region
    $region54: #{gru_rnn_forward.1} parent=1 // pred_check
      _
    $region55: #{gru_rnn_forward.1} parent=1 // pred_check_branch
      %423 = sbr.rel (0) target = $region57
    $region56: #{gru_rnn_forward.1} parent=1 // pred_region
      %425 = dma.done [#allocation4], 128
    $region57: #{gru_rnn_forward.1} parent=1 // pred_fallthru
      _
    // Predicated region
    $region58: #{gru_rnn_forward.1} parent=1 // pred_check
      _
    $region59: #{gru_rnn_forward.1} parent=1 // pred_check_branch
      %427 = sbr.rel (0) target = $region61
    $region60: #{gru_rnn_forward.1} parent=1 // pred_region
      %429 = dma.done [#allocation10], 128
    $region61: #{gru_rnn_forward.1} parent=1 // pred_fallthru
      _
    %430 = vsyncpa [#allocation3], 1
    %431 = vsyncpa [#allocation6], 1
    %432 = vsyncpa [#allocation4], 1
    %433 = vsyncpa [#allocation10], 1

</llo_original>
